<compile_context>
chip_gen: v6e
topology: v6e:2x2x1
jax: 0.10.0
libtpu: 0.0.40
codegen_flags: <defaults>
</compile_context>

<pallas_src>
import math

import jax
import jax.numpy as jnp
from jax.experimental import pallas as pl
from jax.experimental.pallas import tpu as pltpu

_SQRT_2_OVER_PI = math.sqrt(2.0 / math.pi)


def _gelu_tanh(x):
    # Exactly the GELU module from the reference code (tanh approximation).
    return 0.5 * x * (1.0 + jnp.tanh(_SQRT_2_OVER_PI * (x + 0.044715 * x * x * x)))


def _round_up(n, m):
    return ((n + m - 1) // m) * m


def _tpu_config():
    """Generation-aware tile targets / VMEM limit keyed off VMEM capacity."""
    try:
        vmem_bytes = int(getattr(pltpu.get_tpu_info(), "vmem_capacity_bytes"))
    except Exception:
        vmem_bytes = None
    if vmem_bytes is None:
        # Unknown part: conservative tiles that fit any generation's VMEM.
        return {"tm": 512, "tk": 1024,
                "vmem_limit": 48 * 1024 * 1024, "min_row_tiles": 1}
    if vmem_bytes <= 64 * 1024 * 1024:
        # v7x-like: 64 MiB VMEM per TensorCore, 2 TCs/chip.  Keep tiles modest
        # and make sure the "parallel" M axis has >= 2 tiles so both cores work.
        return {"tm": 512, "tk": 1024,
                "vmem_limit": 52 * 1024 * 1024, "min_row_tiles": 2}
    # v5e / v6e: 128 MiB VMEM, single TensorCore -> big tiles, high limit.
    return {"tm": 1024, "tk": 2048,
            "vmem_limit": 96 * 1024 * 1024, "min_row_tiles": 1}


def _pick_reduction_tile(d_ff, tk_target):
    """Pick a lane-aligned reduction tile and the (minimally) padded d_ff it divides.

    Returns (tk_eff, d_ff_pad) with:
      * d_ff_pad = d_ff rounded up to a multiple of 128 (zero-padded weights),
      * tk_eff a multiple of 128 (or == d_ff_pad) that divides d_ff_pad and is
        <= tk_target whenever possible.
    This bounds per-step weight-slab VMEM regardless of how awkward d_ff is.
    """
    d_ff_pad = _round_up(d_ff, 128)
    tk_cap = max(128, (tk_target // 128) * 128)
    if d_ff_pad <= tk_cap:
        # Whole (padded) d_ff in one slab: weight block indices are constant
        # across the grid, so W1/W2 are fetched from HBM exactly once.
        return d_ff_pad, d_ff_pad
    for cand in range(tk_cap, 127, -128):
        if d_ff_pad % cand == 0:
            return cand, d_ff_pad
    return 128, d_ff_pad  # unreachable: 128 always divides d_ff_pad


def ffn_kernel(x_ref, w1_ref, b1_ref, w2_ref, b2_ref, o_ref, acc_ref):
    k = pl.program_id(1)

    @pl.when(k == 0)
    def _():
        # Fold the second-layer bias into the accumulator init (avoids a
        # broadcast + add epilogue on every grid step).
        acc_ref[...] = jnp.broadcast_to(
            b2_ref[...].astype(jnp.float32), acc_ref.shape)

    x = x_ref[...]                                                # (tm, d_model) bf16
    # First matmul on this d_ff slice: bf16 MXU inputs, f32 accumulation.
    h = jnp.dot(x, w1_ref[...], preferred_element_type=jnp.float32)
    h = h + b1_ref[...].astype(jnp.float32)                       # (tm, tk) f32
    # GELU kept in f32 (no bf16 VPU/EUP on v5e; free filler once MXU-bound).
    g = _gelu_tanh(h)
    # Second-matmul contribution of this d_ff slice, accumulated in f32.
    acc_ref[...] += jnp.dot(g.astype(w2_ref.dtype), w2_ref[...],
                            preferred_element_type=jnp.float32)

    @pl.when(k == pl.num_programs(1) - 1)
    def _():
        o_ref[...] = acc_ref[...].astype(o_ref.dtype)


def positionwise_feed_forward(x, w1, b1, w2, b2, *, tm=None, tk=None,
                              compute_dtype=jnp.bfloat16, out_dtype=None,
                              vmem_limit_bytes=None):
    """x: [batch, seq, d_model]; w1: [d_model, d_ff]; w2: [d_ff, d_model].

    Weights are pre-transposed relative to torch's [out, in] layout so the
    kernel computes x @ W1 and g @ W2 directly.  `out_dtype` lets the caller
    emit bf16 output (halves output HBM traffic); defaults to x.dtype.
    """
    batch, seq, d_model = x.shape
    d_ff = w1.shape[1]
    M = batch * seq
    out_dtype = x.dtype if out_dtype is None else out_dtype

    cfg = _tpu_config()
    tm_target = int(tm) if tm is not None else cfg["tm"]
    tk_target = int(tk) if tk is not None else cfg["tk"]
    vmem_limit = int(vmem_limit_bytes) if vmem_limit_bytes is not None \
        else cfg["vmem_limit"]

    # Reduction tile + minimal (zero) padding of d_ff so the tile divides it.
    tk_eff, d_ff_pad = _pick_reduction_tile(d_ff, tk_target)

    # Row tiles: pick tile count first, then balance tm across tiles and round
    # to the bf16 sublane quantum (16).  Avoids padding M up to a tm multiple.
    quantum = 16
    n_rows = max(1, -(-M // tm_target))
    if cfg["min_row_tiles"] > 1 and M >= cfg["min_row_tiles"] * quantum:
        n_rows = max(n_rows, cfg["min_row_tiles"])
    tm_eff = _round_up(-(-M // n_rows), quantum)
    M_pad = tm_eff * n_rows

    x2d = x.reshape(M, d_model).astype(compute_dtype)
    if M_pad != M:
        x2d = jnp.pad(x2d, ((0, M_pad - M), (0, 0)))

    w1c = w1.astype(compute_dtype)
    w2c = w2.astype(compute_dtype)
    b1f = b1.astype(jnp.float32)
    if d_ff_pad != d_ff:
        # Zero-pad the hidden dim: gelu(x@0 + 0) = 0 and the padded W2 rows are
        # zero, so the padded columns contribute exactly nothing.
        w1c = jnp.pad(w1c, ((0, 0), (0, d_ff_pad - d_ff)))
        w2c = jnp.pad(w2c, ((0, d_ff_pad - d_ff), (0, 0)))
        b1f = jnp.pad(b1f, (0, d_ff_pad - d_ff))
    b1_2d = b1f.reshape(1, d_ff_pad)
    b2_2d = b2.reshape(1, d_model).astype(jnp.float32)

    grid = (n_rows, d_ff_pad // tk_eff)

    out2d = pl.pallas_call(
        ffn_kernel,
        out_shape=jax.ShapeDtypeStruct((M_pad, d_model), out_dtype),
        grid_spec=pltpu.PrefetchScalarGridSpec(
            num_scalar_prefetch=0,
            grid=grid,
            in_specs=[
                pl.BlockSpec((tm_eff, d_model), lambda i, k: (i, 0)),   # x rows
                pl.BlockSpec((d_model, tk_eff), lambda i, k: (0, k)),   # W1 slice
                pl.BlockSpec((1, tk_eff), lambda i, k: (0, k)),         # b1 slice
                pl.BlockSpec((tk_eff, d_model), lambda i, k: (k, 0)),   # W2 slice
                pl.BlockSpec((1, d_model), lambda i, k: (0, 0)),        # b2
            ],
            out_specs=pl.BlockSpec((tm_eff, d_model), lambda i, k: (i, 0)),
            scratch_shapes=[pltpu.VMEM((tm_eff, d_model), jnp.float32)],
        ),
        compiler_params=pltpu.CompilerParams(
            dimension_semantics=("parallel", "arbitrary"),
            vmem_limit_bytes=vmem_limit,
        ),
    )(x2d, w1c, b1_2d, w2c, b2_2d)

    if M_pad != M:
        out2d = out2d[:M]
    return out2d.reshape(batch, seq, d_model)


def _reference(x, w1, b1, w2, b2, compute_dtype=jnp.bfloat16):
    """Pure-JAX reference with the same precision policy as the kernel."""
    M = x.shape[0] * x.shape[1]
    xc = x.reshape(M, x.shape[-1]).astype(compute_dtype)
    h = jnp.dot(xc, w1.astype(compute_dtype),
                preferred_element_type=jnp.float32) + b1.astype(jnp.float32)
    g = _gelu_tanh(h)
    o = jnp.dot(g.astype(compute_dtype), w2.astype(compute_dtype),
                preferred_element_type=jnp.float32) + b2.astype(jnp.float32)
    return o.reshape(x.shape).astype(x.dtype)


def _make_params(key, d_model, d_ff):
    k1, k2, k3, k4 = jax.random.split(key, 4)
    bound1 = 1.0 / math.sqrt(d_model)
    bound2 = 1.0 / math.sqrt(d_ff)
    w1 = jax.random.uniform(k1, (d_model, d_ff), jnp.float32, -bound1, bound1)
    b1 = jax.random.uniform(k2, (d_ff,), jnp.float32, -bound1, bound1)
    w2 = jax.random.uniform(k3, (d_ff, d_model), jnp.float32, -bound2, bound2)
    b2 = jax.random.uniform(k4, (d_model,), jnp.float32, -bound2, bound2)
    return w1, b1, w2, b2


if __name__ == "__main__":
    key = jax.random.PRNGKey(0)

    # Primary small test (d_ff gets lane-padded 64 -> 128 inside the wrapper).
    batch, seq, d_model, d_ff = 2, 8, 32, 64
    kx, kp, kx2, kp2 = jax.random.split(key, 4)
    x = jax.random.normal(kx, (batch, seq, d_model), dtype=jnp.float32)
    w1, b1, w2, b2 = _make_params(kp, d_model, d_ff)

    out = positionwise_feed_forward(x, w1, b1, w2, b2)
    out = jax.block_until_ready(out)
    ref = _reference(x, w1, b1, w2, b2)
    assert out.shape == (batch, seq, d_model)
    assert jnp.allclose(out, ref, atol=2e-3, rtol=2e-3), "mismatch vs reference"

    # Second check exercising ragged M (row padding) and non-128 d_ff padding.
    b2_, s2_, dm2_, dff2_ = 3, 5, 128, 320
    x2 = jax.random.normal(kx2, (b2_, s2_, dm2_), dtype=jnp.float32)
    p2 = _make_params(kp2, dm2_, dff2_)
    out2 = jax.block_until_ready(positionwise_feed_forward(x2, *p2))
    ref2 = _reference(x2, *p2)
    assert out2.shape == (b2_, s2_, dm2_)
    assert jnp.allclose(out2, ref2, atol=2e-3, rtol=2e-3), "mismatch (padded case)"

    print("KERNEL_OK")
</pallas_src>

<mosaic_0001>
module attributes {stable_mosaic.version = 11 : i64} {
  func.func @ffn_kernel(%arg0: i32, %arg1: i32, %arg2: memref<16x32xbf16, #tpu.memory_space<vmem>>, %arg3: memref<32x128xbf16, #tpu.memory_space<vmem>>, %arg4: memref<1x128xf32, #tpu.memory_space<vmem>>, %arg5: memref<128x32xbf16, #tpu.memory_space<vmem>>, %arg6: memref<1x32xf32, #tpu.memory_space<vmem>>, %arg7: memref<16x32xf32, #tpu.memory_space<vmem>>, %arg8: memref<16x32xf32, #tpu.memory_space<vmem>>) attributes {dimension_semantics = [#tpu.dimension_semantics<parallel>, #tpu.dimension_semantics<arbitrary>], iteration_bounds = array<i64: 1, 1>, scalar_prefetch = 0 : i64, scratch_operands = 1 : i64, tpu.core_type = #tpu.core_type<tc>, window_params = [{transform_indices = @transform_0, window_bounds = array<i64: 16, 32>}, {transform_indices = @transform_1, window_bounds = array<i64: 32, 128>}, {transform_indices = @transform_2, window_bounds = array<i64: 1, 128>}, {transform_indices = @transform_3, window_bounds = array<i64: 128, 32>}, {pipeline_mode = #tpu.pipeline_mode<synchronous>, transform_indices = @transform_4, window_bounds = array<i64: 1, 32>}, {transform_indices = @transform_5, window_bounds = array<i64: 16, 32>}]} {
    %c0_i32 = arith.constant 0 : i32
    %0 = arith.cmpi eq, %arg1, %c0_i32 : i32
    %1 = arith.extui %0 : i1 to i32
    %c0_i32_0 = arith.constant 0 : i32
    %2 = arith.cmpi ne, %1, %c0_i32_0 : i32
    scf.if %2 {
      %c0_19 = arith.constant 0 : index
      %c0_20 = arith.constant 0 : index
      %31 = vector.load %arg6[%c0_19, %c0_20] : memref<1x32xf32, #tpu.memory_space<vmem>>, vector<1x32xf32>
      %32 = vector.shape_cast %31 : vector<1x32xf32> to vector<1x32xf32>
      %33 = vector.broadcast %32 : vector<1x32xf32> to vector<16x32xf32>
      %c0_21 = arith.constant 0 : index
      %c0_22 = arith.constant 0 : index
      %34 = vector.load %arg8[%c0_21, %c0_22] : memref<16x32xf32, #tpu.memory_space<vmem>>, vector<16x32xf32>
      tpu.vector_store %arg8[%c0_21, %c0_22], %33 {strides = array<i32>} : memref<16x32xf32, #tpu.memory_space<vmem>>, vector<16x32xf32>,
    } else {
    }
    %c0 = arith.constant 0 : index
    %c0_1 = arith.constant 0 : index
    %3 = vector.load %arg2[%c0, %c0_1] : memref<16x32xbf16, #tpu.memory_space<vmem>>, vector<16x32xbf16>
    %c0_2 = arith.constant 0 : index
    %c0_3 = arith.constant 0 : index
    %4 = vector.load %arg3[%c0_2, %c0_3] : memref<32x128xbf16, #tpu.memory_space<vmem>>, vector<32x128xbf16>
    %cst = arith.constant dense<0.000000e+00> : vector<16x128xf32>
    %5 = tpu.matmul %3, %4, %cst {dimension_numbers = #tpu.dot_dimension_numbers<[1], [0], [0], [1], [0, 0, 1, 1], [], []>} : vector<16x32xbf16>, vector<32x128xbf16>, vector<16x128xf32> -> vector<16x128xf32>
    %c0_4 = arith.constant 0 : index
    %c0_5 = arith.constant 0 : index
    %6 = vector.load %arg4[%c0_4, %c0_5] : memref<1x128xf32, #tpu.memory_space<vmem>>, vector<1x128xf32>
    %7 = vector.broadcast %6 : vector<1x128xf32> to vector<16x128xf32>
    %8 = arith.addf %5, %7 : vector<16x128xf32>
    %cst_6 = arith.constant 5.000000e-01 : f32
    %9 = vector.broadcast %cst_6 : f32 to vector<16x128xf32>
    %10 = arith.mulf %9, %8 : vector<16x128xf32>
    %cst_7 = arith.constant 4.471500e-02 : f32
    %11 = vector.broadcast %cst_7 : f32 to vector<16x128xf32>
    %12 = arith.mulf %11, %8 : vector<16x128xf32>
    %13 = arith.mulf %12, %8 : vector<16x128xf32>
    %14 = arith.mulf %13, %8 : vector<16x128xf32>
    %15 = arith.addf %8, %14 : vector<16x128xf32>
    %cst_8 = arith.constant 0.797884583 : f32
    %16 = vector.broadcast %cst_8 : f32 to vector<16x128xf32>
    %17 = arith.mulf %16, %15 : vector<16x128xf32>
    %18 = math.tanh %17 : vector<16x128xf32>
    %cst_9 = arith.constant 1.000000e+00 : f32
    %19 = vector.broadcast %cst_9 : f32 to vector<16x128xf32>
    %20 = arith.addf %19, %18 : vector<16x128xf32>
    %21 = arith.mulf %10, %20 : vector<16x128xf32>
    %c0_10 = arith.constant 0 : index
    %c0_11 = arith.constant 0 : index
    %22 = vector.load %arg8[%c0_10, %c0_11] : memref<16x32xf32, #tpu.memory_space<vmem>>, vector<16x32xf32>
    %23 = arith.truncf %21 : vector<16x128xf32> to vector<16x128xbf16>
    %c0_12 = arith.constant 0 : index
    %c0_13 = arith.constant 0 : index
    %24 = vector.load %arg5[%c0_12, %c0_13] : memref<128x32xbf16, #tpu.memory_space<vmem>>, vector<128x32xbf16>
    %cst_14 = arith.constant dense<0.000000e+00> : vector<16x32xf32>
    %25 = tpu.matmul %23, %24, %cst_14 {dimension_numbers = #tpu.dot_dimension_numbers<[1], [0], [0], [1], [0, 0, 1, 1], [], []>} : vector<16x128xbf16>, vector<128x32xbf16>, vector<16x32xf32> -> vector<16x32xf32>
    %26 = arith.addf %22, %25 : vector<16x32xf32>
    %c0_15 = arith.constant 0 : index
    %c0_16 = arith.constant 0 : index
    %27 = vector.load %arg8[%c0_15, %c0_16] : memref<16x32xf32, #tpu.memory_space<vmem>>, vector<16x32xf32>
    tpu.vector_store %arg8[%c0_15, %c0_16], %26 {strides = array<i32>} : memref<16x32xf32, #tpu.memory_space<vmem>>, vector<16x32xf32>,
    %c0_i32_17 = arith.constant 0 : i32
    %28 = arith.cmpi eq, %arg1, %c0_i32_17 : i32
    %29 = arith.extui %28 : i1 to i32
    %c0_i32_18 = arith.constant 0 : i32
    %30 = arith.cmpi ne, %29, %c0_i32_18 : i32
    scf.if %30 {
      %c0_19 = arith.constant 0 : index
      %c0_20 = arith.constant 0 : index
      %31 = vector.load %arg8[%c0_19, %c0_20] : memref<16x32xf32, #tpu.memory_space<vmem>>, vector<16x32xf32>
      %c0_21 = arith.constant 0 : index
      %c0_22 = arith.constant 0 : index
      %32 = vector.load %arg7[%c0_21, %c0_22] : memref<16x32xf32, #tpu.memory_space<vmem>>, vector<16x32xf32>
      tpu.vector_store %arg7[%c0_21, %c0_22], %31 {strides = array<i32>} : memref<16x32xf32, #tpu.memory_space<vmem>>, vector<16x32xf32>,
    } else {
    }
    return
  }
  func.func @transform_0(%arg0: i32, %arg1: i32) -> (i32, i32) {
    %c0_i32 = arith.constant 0 : i32
    %c0_i32_0 = arith.constant 0 : i32
    return %arg0, %c0_i32 : i32, i32
  }
  func.func @transform_1(%arg0: i32, %arg1: i32) -> (i32, i32) {
    %c0_i32 = arith.constant 0 : i32
    %c0_i32_0 = arith.constant 0 : i32
    return %c0_i32, %arg1 : i32, i32
  }
  func.func @transform_2(%arg0: i32, %arg1: i32) -> (i32, i32) {
    %c0_i32 = arith.constant 0 : i32
    %c0_i32_0 = arith.constant 0 : i32
    return %c0_i32, %arg1 : i32, i32
  }
  func.func @transform_3(%arg0: i32, %arg1: i32) -> (i32, i32) {
    %c0_i32 = arith.constant 0 : i32
    %c0_i32_0 = arith.constant 0 : i32
    return %arg1, %c0_i32 : i32, i32
  }
  func.func @transform_4(%arg0: i32, %arg1: i32) -> (i32, i32) {
    %c0_i32 = arith.constant 0 : i32
    %c0_i32_0 = arith.constant 0 : i32
    %c0_i32_1 = arith.constant 0 : i32
    return %c0_i32, %c0_i32_0 : i32, i32
  }
  func.func @transform_5(%arg0: i32, %arg1: i32) -> (i32, i32) {
    %c0_i32 = arith.constant 0 : i32
    %c0_i32_0 = arith.constant 0 : i32
    return %arg0, %c0_i32 : i32, i32
  }
}

</mosaic_0001>

<llo_original>
// kernel: tpu_custom_call.1
$region0: #{tpu_custom_call.1}
  #allocation0 [shape = 'u32[]', space=smem, size = 0x4, offset = 0x4, fixed_abs, tag = 'smem constant byte address 0x4 - core index']
  #allocation1 [shape = 'u32[144,128]{1,0:T(1,128)}', space=vmem, size = 0x12000, scoped, tag = 'internal scratch']
  #allocation2 [shape = 'f32[16,32]{1,0:T(8,128)}', space=vmem, size = 0x2000, scoped, tag = 'scratch operand']
  %s0 = inlined_call_operand.vmem [shape: bf16[16,32], index: 0, kind: input, shape index: {}]
  %s1 = inlined_call_operand.vmem [shape: bf16[32,128], index: 1, kind: input, shape index: {}]
  %s2 = inlined_call_operand.vmem [shape: f32[1,128], index: 2, kind: input, shape index: {}]
  %s3 = inlined_call_operand.vmem [shape: bf16[128,32], index: 3, kind: input, shape index: {}]
  %s4 = inlined_call_operand.vmem [shape: f32[1,32], index: 4, kind: input, shape index: {}]
  %s5 = inlined_call_operand.hbm [shape: f32[16,32], index: 5, kind: output, shape index: {}]
  %s6 = sld [smem:[#allocation0]]
  $region38: #{tpu_custom_call.1} parent=0
    _
  %s8 = ssub.s32 1, %s6
  %s9 = scalar_select 0, %s8, %s6
  $region1: #{tpu_custom_call.1} parent=0
    #allocation3 [shape = 'u8[8192]{0}', space=vmem, size = 0x2000, scoped, tag = 'output window, operand 0, single buffered']
    #allocation4 [shape = 's32[1]{0}', space=sflag, size = 0x4, scoped, tag = 'scoped memory for tpu_custom_call.1']
    %10 = vsyncpa [#allocation4], 0
    // Predicated region
    $region2: #{tpu_custom_call.1} parent=1 // pred_check
      _
    $region3: #{tpu_custom_call.1} parent=1 // pred_check_branch
      %12 = sbr.rel (0) target = $region5
    $region4: #{tpu_custom_call.1} parent=1 // pred_region
      _
    $region5: #{tpu_custom_call.1} parent=1 // pred_fallthru
      _
    // Predicated region
    $region6: #{tpu_custom_call.1} parent=1 // pred_check
      _
    $region7: #{tpu_custom_call.1} parent=1 // pred_check_branch
      %14 = sbr.rel (0) target = $region9
    $region8: #{tpu_custom_call.1} parent=1 // pred_region
      _
    $region9: #{tpu_custom_call.1} parent=1 // pred_fallthru
      _
    // Predicated region
    $region10: #{tpu_custom_call.1} parent=1 // pred_check
      _
    $region11: #{tpu_custom_call.1} parent=1 // pred_check_branch
      %16 = sbr.rel (0) target = $region13
    $region12: #{tpu_custom_call.1} parent=1 // pred_region
      _
    $region13: #{tpu_custom_call.1} parent=1 // pred_fallthru
      _
    // Predicated region
    $region14: #{tpu_custom_call.1} parent=1 // pred_check
      _
    $region15: #{tpu_custom_call.1} parent=1 // pred_check_branch
      %18 = sbr.rel (0) target = $region17
    $region16: #{tpu_custom_call.1} parent=1 // pred_region
      _
    $region17: #{tpu_custom_call.1} parent=1 // pred_fallthru
      _
    // Predicated region
    $region18: #{tpu_custom_call.1} parent=1 // pred_check
      _
    $region19: #{tpu_custom_call.1} parent=1 // pred_check_branch
      %20 = sbr.rel (0) target = $region21
    $region20: #{tpu_custom_call.1} parent=1 // pred_region
      _
    $region21: #{tpu_custom_call.1} parent=1 // pred_fallthru
      _
    %p22 = scmp.eq.s32.totalorder 0, 0
    // Predicated region
    $region22: #{tpu_custom_call.1} parent=1 // pred_check
      %p23 = pneg %p22
    $region23: #{tpu_custom_call.1} parent=1 // pred_check_branch
      %25 = sbr.rel (%p23) target = $region25
    $region24: #{tpu_custom_call.1} parent=1 // pred_region
      %v26 = vld [vmem:[%s4] sm:$0x1]
      %v28 = vlaneseq
      %v29 = vshrl.u32 %v28, 7
      %v30 = vsub.s32 0, %v29
      %v31 = vrot.slane %v26, %v30
      %vm33 = vcmask 261120
      %34 = vst.msk [vmem:[#allocation2] sm:$0xff] %vm33, %v31
      %35 = vst.msk [vmem:[#allocation2 + $0x8] sm:$0xff] %vm33, %v31
    $region25: #{tpu_custom_call.1} parent=1 // pred_fallthru
      _
    %v36 = vld [vmem:[%s0] sm:$0xf]
    %v37 = vld [vmem:[%s0 + $0x4] sm:$0xf]
    %v38 = vld [vmem:[%s1] sm:$0xf]
    %v39 = vld [vmem:[%s1 + $0x4] sm:$0xf]
    %v40 = vld [vmem:[%s1 + $0x8] sm:$0xf]
    %v41 = vld [vmem:[%s1 + $0xc] sm:$0xf]
    %v42 = vld [vmem:[%s2] sm:$0x1]
    %v44 = vlaneseq
    %v45 = vshrl.u32 %v44, 7
    %v46 = vsub.s32 0, %v45
    %v47 = vrot.slane %v42, %v46
    %v51 = vunpack.c.l.b16 %v36
    %v52 = vunpack.c.l.b16 %v37
    %v53 = vpack.c.b16 %v52, %v51
    %v58 = vunpack.c.l.b16 %v38
    %v59 = vunpack.c.l.b16 %v39
    %v60 = vunpack.c.l.b16 %v40
    %v61 = vunpack.c.l.b16 %v41
    %v62 = vpack.c.b16 %v59, %v58
    %v63 = vpack.c.b16 %v61, %v60
    %vm66 = vcmask 261120
    %v68 = vsel %vm66, %v53, 0
    %70 = vmatprep.subr.bf16.mxu0 0
    %71 = vmatpush1.bf16.msra.mxu0 0
    %72 = vmatprep.subr.bf16.mxu0 0
    %73 = vmatpush1.bf16.msra.mxu0 0
    %74 = vmatprep.subr.bf16.mxu0 0
    %75 = vmatpush1.bf16.msra.mxu0 0
    %76 = vmatprep.subr.bf16.mxu0 0
    %77 = vmatpush1.bf16.msra.mxu0 0
    %78 = vmatprep.subr.bf16.mxu0 0
    %79 = vmatpush1.bf16.msra.mxu0 0
    %80 = vmatprep.subr.bf16.mxu0 0
    %81 = vmatpush1.bf16.msra.mxu0 0
    %82 = vmatprep.subr.bf16.mxu0 0
    %83 = vmatpush1.bf16.msra.mxu0 %v63
    %84 = vmatprep.subr.bf16.mxu0 0
    %85 = vmatpush1.bf16.msra.mxu0 %v62
    %86 = vmatprep.subr.bf16.mxu0 0
    %87 = vmatpush2.bf16.msra.mxu0 0
    %88 = vmatprep.subr.bf16.mxu0 0
    %89 = vmatpush2.bf16.msra.mxu0 0
    %90 = vmatprep.subr.bf16.mxu0 0
    %91 = vmatpush2.bf16.msra.mxu0 0
    %92 = vmatprep.subr.bf16.mxu0 0
    %93 = vmatpush2.bf16.msra.mxu0 0
    %94 = vmatprep.subr.bf16.mxu0 0
    %95 = vmatpush2.bf16.msra.mxu0 0
    %96 = vmatprep.subr.bf16.mxu0 0
    %97 = vmatpush2.bf16.msra.mxu0 0
    %98 = vmatprep.subr.bf16.mxu0 0
    %99 = vmatpush2.bf16.msra.mxu0 0
    %100 = vmatprep.subr.bf16.mxu0 0
    %101 = vmatpush2.bf16.msra.mxu0 0
    %102 = vmatprep.mubr.bf16.mxu0 0
    %103 = vmatmul.mubr.bf16.gmra.mxu0 %v68
    %v104 = vpop.f32.mrf.mxu0
    %v105 = vadd.f32 %v47, %v104
    %v106 = vpop.f32.mrf.mxu0
    %v107 = vpop.f32.mrf.mxu0
    %v108 = vadd.f32 %v47, %v107
    %v109 = vpop.f32.mrf.mxu0
    %110 = vdwg.mxu0
    %v111 = vmul.f32 %v105, 0.5
    %v112 = vmul.f32 %v108, 0.5
    %v113 = vmul.f32 %v105, 0.044715
    %v114 = vmul.f32 %v108, 0.044715
    %v115 = vmul.f32 %v113, %v105
    %v116 = vmul.f32 %v114, %v108
    %v117 = vmul.f32 %v115, %v105
    %v118 = vmul.f32 %v116, %v108
    %v119 = vadd.f32 %v105, %v117
    %v120 = vadd.f32 %v108, %v118
    %v121 = vmul.f32 %v119, 0.7978846
    %v122 = vmul.f32 %v120, 0.7978846
    %v123 = vtanh.pop %v121
    %v124 = vtanh.pop %v122
    %v125 = vadd.f32 %v123, 1.0
    %v126 = vadd.f32 %v124, 1.0
    %v127 = vmul.f32 %v111, %v125
    %v128 = vmul.f32 %v112, %v126
    %v129 = vld [vmem:[#allocation2] sm:$0xff]
    %v130 = vld [vmem:[#allocation2 + $0x8] sm:$0xff]
    %v131 = vpack.c.bf16 %v128, %v127
    %v132 = vld [vmem:[%s3] sm:$0xf]
    %v133 = vld [vmem:[%s3 + $0x4] sm:$0xf]
    %v134 = vld [vmem:[%s3 + $0x8] sm:$0xf]
    %v135 = vld [vmem:[%s3 + $0xc] sm:$0xf]
    %v136 = vld [vmem:[%s3 + $0x10] sm:$0xf]
    %v137 = vld [vmem:[%s3 + $0x14] sm:$0xf]
    %v138 = vld [vmem:[%s3 + $0x18] sm:$0xf]
    %v139 = vld [vmem:[%s3 + $0x1c] sm:$0xf]
    %v140 = vld [vmem:[%s3 + $0x20] sm:$0xf]
    %v141 = vld [vmem:[%s3 + $0x24] sm:$0xf]
    %v142 = vld [vmem:[%s3 + $0x28] sm:$0xf]
    %v143 = vld [vmem:[%s3 + $0x2c] sm:$0xf]
    %v144 = vld [vmem:[%s3 + $0x30] sm:$0xf]
    %v145 = vld [vmem:[%s3 + $0x34] sm:$0xf]
    %v146 = vld [vmem:[%s3 + $0x38] sm:$0xf]
    %v147 = vld [vmem:[%s3 + $0x3c] sm:$0xf]
    %v164 = vunpack.c.l.b16 %v132
    %v165 = vunpack.c.l.b16 %v133
    %v166 = vunpack.c.l.b16 %v134
    %v167 = vunpack.c.l.b16 %v135
    %v168 = vunpack.c.l.b16 %v136
    %v169 = vunpack.c.l.b16 %v137
    %v170 = vunpack.c.l.b16 %v138
    %v171 = vunpack.c.l.b16 %v139
    %v172 = vunpack.c.l.b16 %v140
    %v173 = vunpack.c.l.b16 %v141
    %v174 = vunpack.c.l.b16 %v142
    %v175 = vunpack.c.l.b16 %v143
    %v176 = vunpack.c.l.b16 %v144
    %v177 = vunpack.c.l.b16 %v145
    %v178 = vunpack.c.l.b16 %v146
    %v179 = vunpack.c.l.b16 %v147
    %v180 = vpack.c.b16 %v165, %v164
    %v181 = vpack.c.b16 %v167, %v166
    %v182 = vpack.c.b16 %v169, %v168
    %v183 = vpack.c.b16 %v171, %v170
    %v184 = vpack.c.b16 %v173, %v172
    %v185 = vpack.c.b16 %v175, %v174
    %v186 = vpack.c.b16 %v177, %v176
    %v187 = vpack.c.b16 %v179, %v178
    %196 = vmatprep.subr.bf16.mxu0 0
    %197 = vmatpush1.bf16.msra.mxu0 %v187
    %198 = vmatprep.subr.bf16.mxu0 0
    %199 = vmatpush1.bf16.msra.mxu0 %v186
    %200 = vmatprep.subr.bf16.mxu0 0
    %201 = vmatpush1.bf16.msra.mxu0 %v185
    %202 = vmatprep.subr.bf16.mxu0 0
    %203 = vmatpush1.bf16.msra.mxu0 %v184
    %204 = vmatprep.subr.bf16.mxu0 0
    %205 = vmatpush1.bf16.msra.mxu0 %v183
    %206 = vmatprep.subr.bf16.mxu0 0
    %207 = vmatpush1.bf16.msra.mxu0 %v182
    %208 = vmatprep.subr.bf16.mxu0 0
    %209 = vmatpush1.bf16.msra.mxu0 %v181
    %210 = vmatprep.subr.bf16.mxu0 0
    %211 = vmatpush1.bf16.msra.mxu0 %v180
    %212 = vmatprep.subr.bf16.mxu0 0
    %213 = vmatpush2.bf16.msra.mxu0 0
    %214 = vmatprep.subr.bf16.mxu0 0
    %215 = vmatpush2.bf16.msra.mxu0 0
    %216 = vmatprep.subr.bf16.mxu0 0
    %217 = vmatpush2.bf16.msra.mxu0 0
    %218 = vmatprep.subr.bf16.mxu0 0
    %219 = vmatpush2.bf16.msra.mxu0 0
    %220 = vmatprep.subr.bf16.mxu0 0
    %221 = vmatpush2.bf16.msra.mxu0 0
    %222 = vmatprep.subr.bf16.mxu0 0
    %223 = vmatpush2.bf16.msra.mxu0 0
    %224 = vmatprep.subr.bf16.mxu0 0
    %225 = vmatpush2.bf16.msra.mxu0 0
    %226 = vmatprep.subr.bf16.mxu0 0
    %227 = vmatpush2.bf16.msra.mxu0 0
    %228 = vmatprep.mubr.bf16.mxu0 0
    %229 = vmatmul.mubr.bf16.gmra.mxu0 %v131
    %v230 = vpop.f32.mrf.mxu0
    %v231 = vadd.f32 0.0, %v230
    %v232 = vpop.f32.mrf.mxu0
    %v233 = vpop.f32.mrf.mxu0
    %v234 = vadd.f32 0.0, %v233
    %v235 = vpop.f32.mrf.mxu0
    %236 = vdwg.mxu0
    %v237 = vadd.f32 %v129, %v231
    %v238 = vadd.f32 %v130, %v234
    %239 = vst.msk [vmem:[#allocation2] sm:$0xff] %vm66, %v237
    %240 = vst.msk [vmem:[#allocation2 + $0x8] sm:$0xff] %vm66, %v238
    // Predicated region
    $region26: #{tpu_custom_call.1} parent=1 // pred_check
      %p241 = pneg %p22
    $region27: #{tpu_custom_call.1} parent=1 // pred_check_branch
      %243 = sbr.rel (%p241) target = $region29
    $region28: #{tpu_custom_call.1} parent=1 // pred_region
      %v244 = vld [vmem:[#allocation2] sm:$0xff]
      %v245 = vld [vmem:[#allocation2 + $0x8] sm:$0xff]
      %246 = vst.msk [vmem:[#allocation3] sm:$0xff] %vm66, %v244
      %247 = vst.msk [vmem:[#allocation3 + $0x8] sm:$0xff] %vm66, %v245
    $region29: #{tpu_custom_call.1} parent=1 // pred_fallthru
      _
    // Predicated region
    $region30: #{tpu_custom_call.1} parent=1 // pred_check
      _
    $region31: #{tpu_custom_call.1} parent=1 // pred_check_branch
      %249 = sbr.rel (0) target = $region33
    $region32: #{tpu_custom_call.1} parent=1 // pred_region
      %s251 = ssub.s32 256, 256
      %252 = vsyncadd [#allocation4], %s251
      %s253 = sshll.u32 [#allocation3], 4
      %s254 = int_to_ptr.vmem [resolvable:$true] %s253
      %259 = dma.vmem_to_hbm [thread:$0]  %s254, 256, %s5, [#allocation4], 128, 128, 8
    $region33: #{tpu_custom_call.1} parent=1 // pred_fallthru
      _
    // Predicated region
    $region34: #{tpu_custom_call.1} parent=1 // pred_check
      _
    $region35: #{tpu_custom_call.1} parent=1 // pred_check_branch
      %261 = sbr.rel (0) target = $region37
    $region36: #{tpu_custom_call.1} parent=1 // pred_region
      %262 = dma.done [#allocation4], 256
    $region37: #{tpu_custom_call.1} parent=1 // pred_fallthru
      _
    %263 = vsyncpa [#allocation4], 1

</llo_original>
